<compile_context>
chip_gen: v5e
topology: v5e:2x2
jax: 0.10.0
libtpu: 0.0.40
codegen_flags: <defaults>
</compile_context>

<pallas_src>
from typing import NamedTuple

import jax
import jax.numpy as jnp
from jax.experimental import pallas as pl
from jax.experimental.pallas import tpu as pltpu

LANE = 128          # lane tile (last dim)
SUBLANE_BF16 = 16   # sublane multiple safe for bf16-packed activations (covers f32's 8)


def _round_up(x, m):
    return ((x + m - 1) // m) * m


class AdapterParams(NamedTuple):
    wb: jax.Array        # [K_pad, d_model] bf16  backbone projection weight (K zero-padded)
    bb: jax.Array        # [1, d_model]     f32   backbone bias
    wh: jax.Array        # [d_model, n]     bf16  IncrementalClassifier weight
    bh: jax.Array        # [1, n]           f32   IncrementalClassifier bias
    in_features: int
    d_model: int
    n_classes: int


def prepare_adapter_params(w_backbone, b_backbone, w_head, b_head):
    """One-time (adaptation-time) weight prep, hoisted out of the hot forward path.

    Only the backbone reduction dim K is padded (to a lane multiple); d_model and
    n_classes stay at their true extents so no zero columns are ever streamed.
    """
    Kin, d_model = w_backbone.shape
    n_classes = w_head.shape[1]
    K_pad = _round_up(Kin, LANE)
    wb = jnp.zeros((K_pad, d_model), jnp.bfloat16).at[:Kin, :].set(
        w_backbone.astype(jnp.bfloat16))
    bb = b_backbone.astype(jnp.float32).reshape(1, d_model)
    wh = w_head.astype(jnp.bfloat16)
    bh = b_head.astype(jnp.float32).reshape(1, n_classes)
    return AdapterParams(wb, bb, wh, bh, Kin, d_model, n_classes)


def _fused_kernel(x_ref, wb_ref, bb_ref, wh_ref, bh_ref,
                  feat_ref, logits_ref, acc_ref):
    """Fused backbone projection + IncrementalClassifier head.

    Grid = (batch blocks ["parallel"], K blocks ["arbitrary" reduction]).
    acc_ref: f32 VMEM accumulator holding the resident features tile.
    """
    k = pl.program_id(1)

    @pl.when(k == 0)
    def _():
        acc_ref[...] = jnp.zeros_like(acc_ref)

    # Backbone projection partial product: bf16 x bf16 -> f32 accumulate.
    acc_ref[...] += jnp.dot(x_ref[...], wb_ref[...],
                            preferred_element_type=jnp.float32)

    @pl.when(k == pl.num_programs(1) - 1)
    def _():
        # Finalize in f32: bias add, emit features, then consume them in-VMEM for
        # the classifier head (head matmul + bias fused into the same step).
        feats = acc_ref[...] + bb_ref[...]                       # [TB, D] f32
        feat_ref[...] = feats.astype(feat_ref.dtype)
        logits = jnp.dot(feats.astype(wh_ref.dtype), wh_ref[...],
                         preferred_element_type=jnp.float32) + bh_ref[...]
        logits_ref[...] = logits.astype(logits_ref.dtype)


def _choose_tk(K_pad, TB, D, budget_bytes=8 << 20):
    """Largest K block (multiple of 128 dividing K_pad) whose double-buffered
    streamed operands (x block + W_backbone block, bf16) fit the budget.
    Typical adapter shapes collapse the reduction grid to a single step."""
    per_k = 2 * (TB + D) * 2            # 2 buffers, 2 bytes per bf16 element
    n_k_blocks = K_pad // LANE
    for m in range(1, n_k_blocks + 1):
        if n_k_blocks % m:
            continue
        tk = K_pad // m
        if tk * per_k <= budget_bytes:
            return tk
    return LANE


def _fused_forward_padded(x_p, wb, bb, wh, bh):
    B_pad, K_pad = x_p.shape
    D = wb.shape[1]
    N = wh.shape[1]

    # Batch is the "parallel" axis (megacore / v7x 2nd TC can pick up independent
    # batch blocks once B grows); K reduction is the innermost "arbitrary" axis.
    TB = 128 if (B_pad % 128 == 0) else B_pad
    n_b = B_pad // TB
    tk = _choose_tk(K_pad, TB, D)
    n_k = K_pad // tk

    # Explicit VMEM estimate -> generation-safe limit (<= 40 MiB fits under v7x's
    # 64 MiB physical VMEM, ample on v5e/v6e's 128 MiB).
    est = (2 * (TB * tk + tk * D) * 2            # streamed x, W_backbone (bf16, 2 bufs)
           + 2 * (D * 4 + D * N * 2 + N * 4)     # resident bb, W_head, bh
           + 2 * (TB * D * 4 + TB * N * 4)       # resident features / logits out blocks
           + TB * D * 4)                         # f32 accumulator scratch
    vmem_limit = int(min(max(4 * est, 16 << 20), 40 << 20))

    grid_spec = pltpu.PrefetchScalarGridSpec(
        num_scalar_prefetch=0,
        grid=(n_b, n_k),
        in_specs=[
            pl.BlockSpec((TB, tk), lambda b, k: (b, k)),   # x: stream K blocks
            pl.BlockSpec((tk, D), lambda b, k: (k, 0)),    # W_backbone: stream K blocks
            # Residents (constant index). TODO(synk): at encoder-scale D/N on v7x,
            # single-buffer these (pipeline_mode=pl.Buffered(1) or a manual DMA into
            # scratch) so the resident W_head isn't double-buffered; at these sizes
            # the duplicate is ~1 KiB so the default is kept for portability.
            pl.BlockSpec((1, D), lambda b, k: (0, 0)),     # b_backbone
            pl.BlockSpec((D, N), lambda b, k: (0, 0)),     # W_head
            pl.BlockSpec((1, N), lambda b, k: (0, 0)),     # b_head
        ],
        out_specs=(
            pl.BlockSpec((TB, D), lambda b, k: (b, 0)),    # features (resident over k)
            pl.BlockSpec((TB, N), lambda b, k: (b, 0)),    # logits   (resident over k)
        ),
        scratch_shapes=[pltpu.VMEM((TB, D), jnp.float32)],
    )

    return pl.pallas_call(
        _fused_kernel,
        grid_spec=grid_spec,
        out_shape=(
            jax.ShapeDtypeStruct((B_pad, D), jnp.float32),
            jax.ShapeDtypeStruct((B_pad, N), jnp.float32),
        ),
        compiler_params=pltpu.CompilerParams(
            dimension_semantics=("parallel", "arbitrary"),
            vmem_limit_bytes=vmem_limit,
        ),
    )(x_p, wb, bb, wh, bh)


def avalanche_adapter_forward(x, params: AdapterParams, head_name="classification"):
    """Emulates AvalancheDynamicModuleAdapter.forward for the adapted module.

    For best MXU utilization, batch multiple adapter calls together before
    entering the kernel; at tiny B the kernel is purely HBM-bandwidth bound.
    """
    B = x.shape[0]
    x2 = x.reshape(B, -1)
    Kin = x2.shape[1]
    assert Kin == params.in_features, "input feature dim mismatch"
    K_pad = params.wb.shape[0]

    # Pad batch to a bf16-friendly sublane multiple; activations stream as bf16.
    B_pad = _round_up(max(B, SUBLANE_BF16), SUBLANE_BF16)
    x_p = jnp.zeros((B_pad, K_pad), jnp.bfloat16).at[:B, :Kin].set(
        x2.astype(jnp.bfloat16))

    feat_p, logits_p = _fused_forward_padded(x_p, params.wb, params.bb,
                                             params.wh, params.bh)
    features = feat_p[:B]
    logits = logits_p[:B]

    # Inner (adapted) module output: ({head_name: logits}, features)
    module_output = ({head_name: logits}, features)

    # Adapter glue (mirrors AvalancheDynamicModuleAdapter.forward):
    selected = module_output[0][head_name]
    repacked = (selected,) + tuple(module_output[1:])
    return repacked


if __name__ == "__main__":
    key = jax.random.PRNGKey(0)
    kx, kwb, kbb, kwh, kbh = jax.random.split(key, 5)

    # Small shapes consistent with the module: image-like input flattened by the
    # backbone projection, d_model features, a small incremental-classifier head.
    B, C, H, W = 2, 4, 16, 16
    d_model, n_classes = 32, 10
    Kin = C * H * W  # 1024

    x = jax.random.normal(kx, (B, C, H, W), jnp.float32)
    w_backbone = jax.random.normal(kwb, (Kin, d_model), jnp.float32) * 0.02
    b_backbone = jax.random.normal(kbb, (d_model,), jnp.float32) * 0.02
    w_head = jax.random.normal(kwh, (d_model, n_classes), jnp.float32) * 0.02
    b_head = jax.random.normal(kbh, (n_classes,), jnp.float32) * 0.02

    # One-time (adaptation-time) parameter prep; the per-call forward reuses it.
    params = prepare_adapter_params(w_backbone, b_backbone, w_head, b_head)

    logits, features = avalanche_adapter_forward(x, params,
                                                 head_name="classification")
    jax.block_until_ready((logits, features))

    # Pure-JAX f32 reference check (bf16 streamed operands -> loosened tolerance).
    x2_ref = x.reshape(B, -1)
    feats_ref = x2_ref @ w_backbone + b_backbone
    logits_ref = feats_ref @ w_head + b_head
    assert features.shape == (B, d_model) and logits.shape == (B, n_classes)
    assert jnp.allclose(features, feats_ref, atol=3e-2, rtol=3e-2), "features mismatch"
    assert jnp.allclose(logits, logits_ref, atol=3e-2, rtol=3e-2), "logits mismatch"

    print("KERNEL_OK")
</pallas_src>

<mosaic_0001>
module attributes {stable_mosaic.version = 11 : i64} {
  func.func @_fused_kernel(%arg0: i32, %arg1: i32, %arg2: memref<16x1024xbf16, #tpu.memory_space<vmem>>, %arg3: memref<1024x32xbf16, #tpu.memory_space<vmem>>, %arg4: memref<1x32xf32, #tpu.memory_space<vmem>>, %arg5: memref<32x10xbf16, #tpu.memory_space<vmem>>, %arg6: memref<1x10xf32, #tpu.memory_space<vmem>>, %arg7: memref<16x32xf32, #tpu.memory_space<vmem>>, %arg8: memref<16x10xf32, #tpu.memory_space<vmem>>, %arg9: memref<16x32xf32, #tpu.memory_space<vmem>>) attributes {dimension_semantics = [#tpu.dimension_semantics<parallel>, #tpu.dimension_semantics<arbitrary>], iteration_bounds = array<i64: 1, 1>, scalar_prefetch = 0 : i64, scratch_operands = 1 : i64, tpu.core_type = #tpu.core_type<tc>, window_params = [{transform_indices = @transform_0, window_bounds = array<i64: 16, 1024>}, {transform_indices = @transform_1, window_bounds = array<i64: 1024, 32>}, {pipeline_mode = #tpu.pipeline_mode<synchronous>, transform_indices = @transform_2, window_bounds = array<i64: 1, 32>}, {pipeline_mode = #tpu.pipeline_mode<synchronous>, transform_indices = @transform_3, window_bounds = array<i64: 32, 10>}, {pipeline_mode = #tpu.pipeline_mode<synchronous>, transform_indices = @transform_4, window_bounds = array<i64: 1, 10>}, {transform_indices = @transform_5, window_bounds = array<i64: 16, 32>}, {transform_indices = @transform_6, window_bounds = array<i64: 16, 10>}]} {
    %c0_i32 = arith.constant 0 : i32
    %0 = arith.cmpi eq, %arg1, %c0_i32 : i32
    %1 = arith.extui %0 : i1 to i32
    %c0_i32_0 = arith.constant 0 : i32
    %2 = arith.cmpi ne, %1, %c0_i32_0 : i32
    scf.if %2 {
      %cst_10 = arith.constant 0.000000e+00 : f32
      %12 = vector.broadcast %cst_10 : f32 to vector<16x32xf32>
      %c0_11 = arith.constant 0 : index
      %c0_12 = arith.constant 0 : index
      %13 = vector.load %arg9[%c0_11, %c0_12] : memref<16x32xf32, #tpu.memory_space<vmem>>, vector<16x32xf32>
      tpu.vector_store %arg9[%c0_11, %c0_12], %12 {strides = array<i32>} : memref<16x32xf32, #tpu.memory_space<vmem>>, vector<16x32xf32>,
    } else {
    }
    %c0 = arith.constant 0 : index
    %c0_1 = arith.constant 0 : index
    %3 = vector.load %arg9[%c0, %c0_1] : memref<16x32xf32, #tpu.memory_space<vmem>>, vector<16x32xf32>
    %c0_2 = arith.constant 0 : index
    %c0_3 = arith.constant 0 : index
    %4 = vector.load %arg2[%c0_2, %c0_3] : memref<16x1024xbf16, #tpu.memory_space<vmem>>, vector<16x1024xbf16>
    %c0_4 = arith.constant 0 : index
    %c0_5 = arith.constant 0 : index
    %5 = vector.load %arg3[%c0_4, %c0_5] : memref<1024x32xbf16, #tpu.memory_space<vmem>>, vector<1024x32xbf16>
    %cst = arith.constant dense<0.000000e+00> : vector<16x32xf32>
    %6 = tpu.matmul %4, %5, %cst {dimension_numbers = #tpu.dot_dimension_numbers<[1], [0], [0], [1], [0, 0, 1, 1], [], []>} : vector<16x1024xbf16>, vector<1024x32xbf16>, vector<16x32xf32> -> vector<16x32xf32>
    %7 = arith.addf %3, %6 : vector<16x32xf32>
    %c0_6 = arith.constant 0 : index
    %c0_7 = arith.constant 0 : index
    %8 = vector.load %arg9[%c0_6, %c0_7] : memref<16x32xf32, #tpu.memory_space<vmem>>, vector<16x32xf32>
    tpu.vector_store %arg9[%c0_6, %c0_7], %7 {strides = array<i32>} : memref<16x32xf32, #tpu.memory_space<vmem>>, vector<16x32xf32>,
    %c0_i32_8 = arith.constant 0 : i32
    %9 = arith.cmpi eq, %arg1, %c0_i32_8 : i32
    %10 = arith.extui %9 : i1 to i32
    %c0_i32_9 = arith.constant 0 : i32
    %11 = arith.cmpi ne, %10, %c0_i32_9 : i32
    scf.if %11 {
      %c0_10 = arith.constant 0 : index
      %c0_11 = arith.constant 0 : index
      %12 = vector.load %arg9[%c0_10, %c0_11] : memref<16x32xf32, #tpu.memory_space<vmem>>, vector<16x32xf32>
      %c0_12 = arith.constant 0 : index
      %c0_13 = arith.constant 0 : index
      %13 = vector.load %arg4[%c0_12, %c0_13] : memref<1x32xf32, #tpu.memory_space<vmem>>, vector<1x32xf32>
      %14 = vector.broadcast %13 : vector<1x32xf32> to vector<16x32xf32>
      %15 = arith.addf %12, %14 : vector<16x32xf32>
      %c0_14 = arith.constant 0 : index
      %c0_15 = arith.constant 0 : index
      %16 = vector.load %arg7[%c0_14, %c0_15] : memref<16x32xf32, #tpu.memory_space<vmem>>, vector<16x32xf32>
      tpu.vector_store %arg7[%c0_14, %c0_15], %15 {strides = array<i32>} : memref<16x32xf32, #tpu.memory_space<vmem>>, vector<16x32xf32>,
      %17 = arith.truncf %15 : vector<16x32xf32> to vector<16x32xbf16>
      %c0_16 = arith.constant 0 : index
      %c0_17 = arith.constant 0 : index
      %18 = vector.load %arg5[%c0_16, %c0_17] : memref<32x10xbf16, #tpu.memory_space<vmem>>, vector<32x10xbf16>
      %cst_18 = arith.constant dense<0.000000e+00> : vector<16x10xf32>
      %19 = tpu.matmul %17, %18, %cst_18 {dimension_numbers = #tpu.dot_dimension_numbers<[1], [0], [0], [1], [0, 0, 1, 1], [], []>} : vector<16x32xbf16>, vector<32x10xbf16>, vector<16x10xf32> -> vector<16x10xf32>
      %c0_19 = arith.constant 0 : index
      %c0_20 = arith.constant 0 : index
      %20 = vector.load %arg6[%c0_19, %c0_20] : memref<1x10xf32, #tpu.memory_space<vmem>>, vector<1x10xf32>
      %21 = vector.broadcast %20 : vector<1x10xf32> to vector<16x10xf32>
      %22 = arith.addf %19, %21 : vector<16x10xf32>
      %c0_21 = arith.constant 0 : index
      %c0_22 = arith.constant 0 : index
      %23 = vector.load %arg8[%c0_21, %c0_22] : memref<16x10xf32, #tpu.memory_space<vmem>>, vector<16x10xf32>
      tpu.vector_store %arg8[%c0_21, %c0_22], %22 {strides = array<i32>} : memref<16x10xf32, #tpu.memory_space<vmem>>, vector<16x10xf32>,
    } else {
    }
    return
  }
  func.func @transform_0(%arg0: i32, %arg1: i32) -> (i32, i32) {
    %c0_i32 = arith.constant 0 : i32
    return %arg0, %arg1 : i32, i32
  }
  func.func @transform_1(%arg0: i32, %arg1: i32) -> (i32, i32) {
    %c0_i32 = arith.constant 0 : i32
    %c0_i32_0 = arith.constant 0 : i32
    return %arg1, %c0_i32 : i32, i32
  }
  func.func @transform_2(%arg0: i32, %arg1: i32) -> (i32, i32) {
    %c0_i32 = arith.constant 0 : i32
    %c0_i32_0 = arith.constant 0 : i32
    %c0_i32_1 = arith.constant 0 : i32
    return %c0_i32, %c0_i32_0 : i32, i32
  }
  func.func @transform_3(%arg0: i32, %arg1: i32) -> (i32, i32) {
    %c0_i32 = arith.constant 0 : i32
    %c0_i32_0 = arith.constant 0 : i32
    %c0_i32_1 = arith.constant 0 : i32
    return %c0_i32, %c0_i32_0 : i32, i32
  }
  func.func @transform_4(%arg0: i32, %arg1: i32) -> (i32, i32) {
    %c0_i32 = arith.constant 0 : i32
    %c0_i32_0 = arith.constant 0 : i32
    %c0_i32_1 = arith.constant 0 : i32
    return %c0_i32, %c0_i32_0 : i32, i32
  }
  func.func @transform_5(%arg0: i32, %arg1: i32) -> (i32, i32) {
    %c0_i32 = arith.constant 0 : i32
    %c0_i32_0 = arith.constant 0 : i32
    return %arg0, %c0_i32 : i32, i32
  }
  func.func @transform_6(%arg0: i32, %arg1: i32) -> (i32, i32) {
    %c0_i32 = arith.constant 0 : i32
    %c0_i32_0 = arith.constant 0 : i32
    return %arg0, %c0_i32 : i32, i32
  }
}

</mosaic_0001>

<llo_original>
// kernel: tpu_custom_call.1
$region0: #{tpu_custom_call.1}
  #allocation0 [shape = 'u32[]', space=smem, size = 0x4, offset = 0x4, fixed_abs, tag = 'smem constant byte address 0x4 - core index']
  #allocation1 [shape = 'u32[72,128]{1,0:T(1,128)}', space=vmem, size = 0x9000, scoped, tag = 'internal scratch']
  #allocation2 [shape = 'f32[16,32]{1,0:T(8,128)}', space=vmem, size = 0x2000, scoped, tag = 'scratch operand']
  %s0 = inlined_call_operand.vmem [shape: bf16[16,1024], index: 0, kind: input, shape index: {}]
  %s1 = inlined_call_operand.vmem [shape: bf16[1024,32], index: 1, kind: input, shape index: {}]
  %s2 = inlined_call_operand.vmem [shape: f32[1,32], index: 2, kind: input, shape index: {}]
  %s3 = inlined_call_operand.vmem [shape: bf16[32,10], index: 3, kind: input, shape index: {}]
  %s4 = inlined_call_operand.vmem [shape: f32[1,10], index: 4, kind: input, shape index: {}]
  %s5 = inlined_call_operand.hbm [shape: f32[16,32], index: 5, kind: output, shape index: {0}]
  %s6 = inlined_call_operand.hbm [shape: f32[16,10], index: 6, kind: output, shape index: {1}]
  %7 = xla_tuple %s5, %s6
  %s8 = sld [smem:[#allocation0]]
  $region46: #{tpu_custom_call.1} parent=0
    _
  %s10 = ssub.s32 1, %s8
  %s11 = scalar_select 0, %s10, %s8
  $region1: #{tpu_custom_call.1} parent=0
    #allocation3 [shape = 'u8[8192]{0}', space=vmem, size = 0x2000, scoped, tag = 'output window, operand 0, single buffered']
    #allocation4 [shape = 's32[1]{0}', space=sflag, size = 0x4, scoped, tag = 'scoped memory for tpu_custom_call.1']
    #allocation5 [shape = 'u8[8192]{0}', space=vmem, size = 0x2000, scoped, tag = 'output window, operand 1, single buffered']
    #allocation6 [shape = 's32[1]{0}', space=sflag, size = 0x4, scoped, tag = 'scoped memory for tpu_custom_call.1']
    %12 = vsyncpa [#allocation4], 0
    %13 = vsyncpa [#allocation6], 0
    // Predicated region
    $region2: #{tpu_custom_call.1} parent=1 // pred_check
      _
    $region3: #{tpu_custom_call.1} parent=1 // pred_check_branch
      %15 = sbr.rel (0) target = $region5
    $region4: #{tpu_custom_call.1} parent=1 // pred_region
      _
    $region5: #{tpu_custom_call.1} parent=1 // pred_fallthru
      _
    // Predicated region
    $region6: #{tpu_custom_call.1} parent=1 // pred_check
      _
    $region7: #{tpu_custom_call.1} parent=1 // pred_check_branch
      %17 = sbr.rel (0) target = $region9
    $region8: #{tpu_custom_call.1} parent=1 // pred_region
      _
    $region9: #{tpu_custom_call.1} parent=1 // pred_fallthru
      _
    // Predicated region
    $region10: #{tpu_custom_call.1} parent=1 // pred_check
      _
    $region11: #{tpu_custom_call.1} parent=1 // pred_check_branch
      %19 = sbr.rel (0) target = $region13
    $region12: #{tpu_custom_call.1} parent=1 // pred_region
      _
    $region13: #{tpu_custom_call.1} parent=1 // pred_fallthru
      _
    // Predicated region
    $region14: #{tpu_custom_call.1} parent=1 // pred_check
      _
    $region15: #{tpu_custom_call.1} parent=1 // pred_check_branch
      %21 = sbr.rel (0) target = $region17
    $region16: #{tpu_custom_call.1} parent=1 // pred_region
      _
    $region17: #{tpu_custom_call.1} parent=1 // pred_fallthru
      _
    // Predicated region
    $region18: #{tpu_custom_call.1} parent=1 // pred_check
      _
    $region19: #{tpu_custom_call.1} parent=1 // pred_check_branch
      %23 = sbr.rel (0) target = $region21
    $region20: #{tpu_custom_call.1} parent=1 // pred_region
      _
    $region21: #{tpu_custom_call.1} parent=1 // pred_fallthru
      _
    %p25 = scmp.eq.s32.totalorder 0, 0
    // Predicated region
    $region22: #{tpu_custom_call.1} parent=1 // pred_check
      %p26 = pneg %p25
    $region23: #{tpu_custom_call.1} parent=1 // pred_check_branch
      %28 = sbr.rel (%p26) target = $region25
    $region24: #{tpu_custom_call.1} parent=1 // pred_region
      %vm29 = vcmask 261120
      %30 = vst.msk [vmem:[#allocation2] sm:$0xff] %vm29, 0.0
      %31 = vst.msk [vmem:[#allocation2 + $0x8] sm:$0xff] %vm29, 0.0
    $region25: #{tpu_custom_call.1} parent=1 // pred_fallthru
      _
    %v32 = vld [vmem:[#allocation2] sm:$0xff]
    %v33 = vld [vmem:[#allocation2 + $0x8] sm:$0xff]
    %v34 = vld [vmem:[%s0] sm:$0xff]
    %v35 = vld [vmem:[%s0 + $0x8] sm:$0xff]
    %v36 = vld [vmem:[%s0 + $0x10] sm:$0xff]
    %v37 = vld [vmem:[%s0 + $0x18] sm:$0xff]
    %v38 = vld [vmem:[%s0 + $0x20] sm:$0xff]
    %v39 = vld [vmem:[%s0 + $0x28] sm:$0xff]
    %v40 = vld [vmem:[%s0 + $0x30] sm:$0xff]
    %v41 = vld [vmem:[%s0 + $0x38] sm:$0xff]
    %v42 = vld [vmem:[%s1] sm:$0xf]
    %v43 = vld [vmem:[%s1 + $0x4] sm:$0xf]
    %v44 = vld [vmem:[%s1 + $0x8] sm:$0xf]
    %v45 = vld [vmem:[%s1 + $0xc] sm:$0xf]
    %v46 = vld [vmem:[%s1 + $0x10] sm:$0xf]
    %v47 = vld [vmem:[%s1 + $0x14] sm:$0xf]
    %v48 = vld [vmem:[%s1 + $0x18] sm:$0xf]
    %v49 = vld [vmem:[%s1 + $0x1c] sm:$0xf]
    %v50 = vld [vmem:[%s1 + $0x20] sm:$0xf]
    %v51 = vld [vmem:[%s1 + $0x24] sm:$0xf]
    %v52 = vld [vmem:[%s1 + $0x28] sm:$0xf]
    %v53 = vld [vmem:[%s1 + $0x2c] sm:$0xf]
    %v54 = vld [vmem:[%s1 + $0x30] sm:$0xf]
    %v55 = vld [vmem:[%s1 + $0x34] sm:$0xf]
    %v56 = vld [vmem:[%s1 + $0x38] sm:$0xf]
    %v57 = vld [vmem:[%s1 + $0x3c] sm:$0xf]
    %v58 = vld [vmem:[%s1 + $0x40] sm:$0xf]
    %v59 = vld [vmem:[%s1 + $0x44] sm:$0xf]
    %v60 = vld [vmem:[%s1 + $0x48] sm:$0xf]
    %v61 = vld [vmem:[%s1 + $0x4c] sm:$0xf]
    %v62 = vld [vmem:[%s1 + $0x50] sm:$0xf]
    %v63 = vld [vmem:[%s1 + $0x54] sm:$0xf]
    %v64 = vld [vmem:[%s1 + $0x58] sm:$0xf]
    %v65 = vld [vmem:[%s1 + $0x5c] sm:$0xf]
    %v66 = vld [vmem:[%s1 + $0x60] sm:$0xf]
    %v67 = vld [vmem:[%s1 + $0x64] sm:$0xf]
    %v68 = vld [vmem:[%s1 + $0x68] sm:$0xf]
    %v69 = vld [vmem:[%s1 + $0x6c] sm:$0xf]
    %v70 = vld [vmem:[%s1 + $0x70] sm:$0xf]
    %v71 = vld [vmem:[%s1 + $0x74] sm:$0xf]
    %v72 = vld [vmem:[%s1 + $0x78] sm:$0xf]
    %v73 = vld [vmem:[%s1 + $0x7c] sm:$0xf]
    %v74 = vld [vmem:[%s1 + $0x80] sm:$0xf]
    %v75 = vld [vmem:[%s1 + $0x84] sm:$0xf]
    %v76 = vld [vmem:[%s1 + $0x88] sm:$0xf]
    %v77 = vld [vmem:[%s1 + $0x8c] sm:$0xf]
    %v78 = vld [vmem:[%s1 + $0x90] sm:$0xf]
    %v79 = vld [vmem:[%s1 + $0x94] sm:$0xf]
    %v80 = vld [vmem:[%s1 + $0x98] sm:$0xf]
    %v81 = vld [vmem:[%s1 + $0x9c] sm:$0xf]
    %v82 = vld [vmem:[%s1 + $0xa0] sm:$0xf]
    %v83 = vld [vmem:[%s1 + $0xa4] sm:$0xf]
    %v84 = vld [vmem:[%s1 + $0xa8] sm:$0xf]
    %v85 = vld [vmem:[%s1 + $0xac] sm:$0xf]
    %v86 = vld [vmem:[%s1 + $0xb0] sm:$0xf]
    %v87 = vld [vmem:[%s1 + $0xb4] sm:$0xf]
    %v88 = vld [vmem:[%s1 + $0xb8] sm:$0xf]
    %v89 = vld [vmem:[%s1 + $0xbc] sm:$0xf]
    %v90 = vld [vmem:[%s1 + $0xc0] sm:$0xf]
    %v91 = vld [vmem:[%s1 + $0xc4] sm:$0xf]
    %v92 = vld [vmem:[%s1 + $0xc8] sm:$0xf]
    %v93 = vld [vmem:[%s1 + $0xcc] sm:$0xf]
    %v94 = vld [vmem:[%s1 + $0xd0] sm:$0xf]
    %v95 = vld [vmem:[%s1 + $0xd4] sm:$0xf]
    %v96 = vld [vmem:[%s1 + $0xd8] sm:$0xf]
    %v97 = vld [vmem:[%s1 + $0xdc] sm:$0xf]
    %v98 = vld [vmem:[%s1 + $0xe0] sm:$0xf]
    %v99 = vld [vmem:[%s1 + $0xe4] sm:$0xf]
    %v100 = vld [vmem:[%s1 + $0xe8] sm:$0xf]
    %v101 = vld [vmem:[%s1 + $0xec] sm:$0xf]
    %v102 = vld [vmem:[%s1 + $0xf0] sm:$0xf]
    %v103 = vld [vmem:[%s1 + $0xf4] sm:$0xf]
    %v104 = vld [vmem:[%s1 + $0xf8] sm:$0xf]
    %v105 = vld [vmem:[%s1 + $0xfc] sm:$0xf]
    %v106 = vld [vmem:[%s1 + $0x100] sm:$0xf]
    %v107 = vld [vmem:[%s1 + $0x104] sm:$0xf]
    %v108 = vld [vmem:[%s1 + $0x108] sm:$0xf]
    %v109 = vld [vmem:[%s1 + $0x10c] sm:$0xf]
    %v110 = vld [vmem:[%s1 + $0x110] sm:$0xf]
    %v111 = vld [vmem:[%s1 + $0x114] sm:$0xf]
    %v112 = vld [vmem:[%s1 + $0x118] sm:$0xf]
    %v113 = vld [vmem:[%s1 + $0x11c] sm:$0xf]
    %v114 = vld [vmem:[%s1 + $0x120] sm:$0xf]
    %v115 = vld [vmem:[%s1 + $0x124] sm:$0xf]
    %v116 = vld [vmem:[%s1 + $0x128] sm:$0xf]
    %v117 = vld [vmem:[%s1 + $0x12c] sm:$0xf]
    %v118 = vld [vmem:[%s1 + $0x130] sm:$0xf]
    %v119 = vld [vmem:[%s1 + $0x134] sm:$0xf]
    %v120 = vld [vmem:[%s1 + $0x138] sm:$0xf]
    %v121 = vld [vmem:[%s1 + $0x13c] sm:$0xf]
    %v122 = vld [vmem:[%s1 + $0x140] sm:$0xf]
    %v123 = vld [vmem:[%s1 + $0x144] sm:$0xf]
    %v124 = vld [vmem:[%s1 + $0x148] sm:$0xf]
    %v125 = vld [vmem:[%s1 + $0x14c] sm:$0xf]
    %v126 = vld [vmem:[%s1 + $0x150] sm:$0xf]
    %v127 = vld [vmem:[%s1 + $0x154] sm:$0xf]
    %v128 = vld [vmem:[%s1 + $0x158] sm:$0xf]
    %v129 = vld [vmem:[%s1 + $0x15c] sm:$0xf]
    %v130 = vld [vmem:[%s1 + $0x160] sm:$0xf]
    %v131 = vld [vmem:[%s1 + $0x164] sm:$0xf]
    %v132 = vld [vmem:[%s1 + $0x168] sm:$0xf]
    %v133 = vld [vmem:[%s1 + $0x16c] sm:$0xf]
    %v134 = vld [vmem:[%s1 + $0x170] sm:$0xf]
    %v135 = vld [vmem:[%s1 + $0x174] sm:$0xf]
    %v136 = vld [vmem:[%s1 + $0x178] sm:$0xf]
    %v137 = vld [vmem:[%s1 + $0x17c] sm:$0xf]
    %v138 = vld [vmem:[%s1 + $0x180] sm:$0xf]
    %v139 = vld [vmem:[%s1 + $0x184] sm:$0xf]
    %v140 = vld [vmem:[%s1 + $0x188] sm:$0xf]
    %v141 = vld [vmem:[%s1 + $0x18c] sm:$0xf]
    %v142 = vld [vmem:[%s1 + $0x190] sm:$0xf]
    %v143 = vld [vmem:[%s1 + $0x194] sm:$0xf]
    %v144 = vld [vmem:[%s1 + $0x198] sm:$0xf]
    %v145 = vld [vmem:[%s1 + $0x19c] sm:$0xf]
    %v146 = vld [vmem:[%s1 + $0x1a0] sm:$0xf]
    %v147 = vld [vmem:[%s1 + $0x1a4] sm:$0xf]
    %v148 = vld [vmem:[%s1 + $0x1a8] sm:$0xf]
    %v149 = vld [vmem:[%s1 + $0x1ac] sm:$0xf]
    %v150 = vld [vmem:[%s1 + $0x1b0] sm:$0xf]
    %v151 = vld [vmem:[%s1 + $0x1b4] sm:$0xf]
    %v152 = vld [vmem:[%s1 + $0x1b8] sm:$0xf]
    %v153 = vld [vmem:[%s1 + $0x1bc] sm:$0xf]
    %v154 = vld [vmem:[%s1 + $0x1c0] sm:$0xf]
    %v155 = vld [vmem:[%s1 + $0x1c4] sm:$0xf]
    %v156 = vld [vmem:[%s1 + $0x1c8] sm:$0xf]
    %v157 = vld [vmem:[%s1 + $0x1cc] sm:$0xf]
    %v158 = vld [vmem:[%s1 + $0x1d0] sm:$0xf]
    %v159 = vld [vmem:[%s1 + $0x1d4] sm:$0xf]
    %v160 = vld [vmem:[%s1 + $0x1d8] sm:$0xf]
    %v161 = vld [vmem:[%s1 + $0x1dc] sm:$0xf]
    %v162 = vld [vmem:[%s1 + $0x1e0] sm:$0xf]
    %v163 = vld [vmem:[%s1 + $0x1e4] sm:$0xf]
    %v164 = vld [vmem:[%s1 + $0x1e8] sm:$0xf]
    %v165 = vld [vmem:[%s1 + $0x1ec] sm:$0xf]
    %v166 = vld [vmem:[%s1 + $0x1f0] sm:$0xf]
    %v167 = vld [vmem:[%s1 + $0x1f4] sm:$0xf]
    %v168 = vld [vmem:[%s1 + $0x1f8] sm:$0xf]
    %v169 = vld [vmem:[%s1 + $0x1fc] sm:$0xf]
    %v178 = vunpack.c.l.b16 %v34
    %v179 = vunpack.c.h.b16 %v34
    %v180 = vunpack.c.l.b16 %v35
    %v181 = vunpack.c.h.b16 %v35
    %v182 = vunpack.c.l.b16 %v36
    %v183 = vunpack.c.h.b16 %v36
    %v184 = vunpack.c.l.b16 %v37
    %v185 = vunpack.c.h.b16 %v37
    %v186 = vunpack.c.l.b16 %v38
    %v187 = vunpack.c.h.b16 %v38
    %v188 = vunpack.c.l.b16 %v39
    %v189 = vunpack.c.h.b16 %v39
    %v190 = vunpack.c.l.b16 %v40
    %v191 = vunpack.c.h.b16 %v40
    %v192 = vunpack.c.l.b16 %v41
    %v193 = vunpack.c.h.b16 %v41
    %v194 = vpack.c.b16 %v186, %v178
    %v195 = vpack.c.b16 %v187, %v179
    %v196 = vpack.c.b16 %v188, %v180
    %v197 = vpack.c.b16 %v189, %v181
    %v198 = vpack.c.b16 %v190, %v182
    %v199 = vpack.c.b16 %v191, %v183
    %v200 = vpack.c.b16 %v192, %v184
    %v201 = vpack.c.b16 %v193, %v185
    %v338 = vunpack.c.l.b16 %v42
    %v339 = vunpack.c.l.b16 %v43
    %v340 = vunpack.c.l.b16 %v44
    %v341 = vunpack.c.l.b16 %v45
    %v342 = vunpack.c.l.b16 %v46
    %v343 = vunpack.c.l.b16 %v47
    %v344 = vunpack.c.l.b16 %v48
    %v345 = vunpack.c.l.b16 %v49
    %v346 = vunpack.c.l.b16 %v50
    %v347 = vunpack.c.l.b16 %v51
    %v348 = vunpack.c.l.b16 %v52
    %v349 = vunpack.c.l.b16 %v53
    %v350 = vunpack.c.l.b16 %v54
    %v351 = vunpack.c.l.b16 %v55
    %v352 = vunpack.c.l.b16 %v56
    %v353 = vunpack.c.l.b16 %v57
    %v354 = vunpack.c.l.b16 %v58
    %v355 = vunpack.c.l.b16 %v59
    %v356 = vunpack.c.l.b16 %v60
    %v357 = vunpack.c.l.b16 %v61
    %v358 = vunpack.c.l.b16 %v62
    %v359 = vunpack.c.l.b16 %v63
    %v360 = vunpack.c.l.b16 %v64
    %v361 = vunpack.c.l.b16 %v65
    %v362 = vunpack.c.l.b16 %v66
    %v363 = vunpack.c.l.b16 %v67
    %v364 = vunpack.c.l.b16 %v68
    %v365 = vunpack.c.l.b16 %v69
    %v366 = vunpack.c.l.b16 %v70
    %v367 = vunpack.c.l.b16 %v71
    %v368 = vunpack.c.l.b16 %v72
    %v369 = vunpack.c.l.b16 %v73
    %v370 = vunpack.c.l.b16 %v74
    %v371 = vunpack.c.l.b16 %v75
    %v372 = vunpack.c.l.b16 %v76
    %v373 = vunpack.c.l.b16 %v77
    %v374 = vunpack.c.l.b16 %v78
    %v375 = vunpack.c.l.b16 %v79
    %v376 = vunpack.c.l.b16 %v80
    %v377 = vunpack.c.l.b16 %v81
    %v378 = vunpack.c.l.b16 %v82
    %v379 = vunpack.c.l.b16 %v83
    %v380 = vunpack.c.l.b16 %v84
    %v381 = vunpack.c.l.b16 %v85
    %v382 = vunpack.c.l.b16 %v86
    %v383 = vunpack.c.l.b16 %v87
    %v384 = vunpack.c.l.b16 %v88
    %v385 = vunpack.c.l.b16 %v89
    %v386 = vunpack.c.l.b16 %v90
    %v387 = vunpack.c.l.b16 %v91
    %v388 = vunpack.c.l.b16 %v92
    %v389 = vunpack.c.l.b16 %v93
    %v390 = vunpack.c.l.b16 %v94
    %v391 = vunpack.c.l.b16 %v95
    %v392 = vunpack.c.l.b16 %v96
    %v393 = vunpack.c.l.b16 %v97
    %v394 = vunpack.c.l.b16 %v98
    %v395 = vunpack.c.l.b16 %v99
    %v396 = vunpack.c.l.b16 %v100
    %v397 = vunpack.c.l.b16 %v101
    %v398 = vunpack.c.l.b16 %v102
    %v399 = vunpack.c.l.b16 %v103
    %v400 = vunpack.c.l.b16 %v104
    %v401 = vunpack.c.l.b16 %v105
    %v402 = vunpack.c.l.b16 %v106
    %v403 = vunpack.c.l.b16 %v107
    %v404 = vunpack.c.l.b16 %v108
    %v405 = vunpack.c.l.b16 %v109
    %v406 = vunpack.c.l.b16 %v110
    %v407 = vunpack.c.l.b16 %v111
    %v408 = vunpack.c.l.b16 %v112
    %v409 = vunpack.c.l.b16 %v113
    %v410 = vunpack.c.l.b16 %v114
    %v411 = vunpack.c.l.b16 %v115
    %v412 = vunpack.c.l.b16 %v116
    %v413 = vunpack.c.l.b16 %v117
    %v414 = vunpack.c.l.b16 %v118
    %v415 = vunpack.c.l.b16 %v119
    %v416 = vunpack.c.l.b16 %v120
    %v417 = vunpack.c.l.b16 %v121
    %v418 = vunpack.c.l.b16 %v122
    %v419 = vunpack.c.l.b16 %v123
    %v420 = vunpack.c.l.b16 %v124
    %v421 = vunpack.c.l.b16 %v125
    %v422 = vunpack.c.l.b16 %v126
    %v423 = vunpack.c.l.b16 %v127
    %v424 = vunpack.c.l.b16 %v128
    %v425 = vunpack.c.l.b16 %v129
    %v426 = vunpack.c.l.b16 %v130
    %v427 = vunpack.c.l.b16 %v131
    %v428 = vunpack.c.l.b16 %v132
    %v429 = vunpack.c.l.b16 %v133
    %v430 = vunpack.c.l.b16 %v134
    %v431 = vunpack.c.l.b16 %v135
    %v432 = vunpack.c.l.b16 %v136
    %v433 = vunpack.c.l.b16 %v137
    %v434 = vunpack.c.l.b16 %v138
    %v435 = vunpack.c.l.b16 %v139
    %v436 = vunpack.c.l.b16 %v140
    %v437 = vunpack.c.l.b16 %v141
    %v438 = vunpack.c.l.b16 %v142
    %v439 = vunpack.c.l.b16 %v143
    %v440 = vunpack.c.l.b16 %v144
    %v441 = vunpack.c.l.b16 %v145
    %v442 = vunpack.c.l.b16 %v146
    %v443 = vunpack.c.l.b16 %v147
    %v444 = vunpack.c.l.b16 %v148
    %v445 = vunpack.c.l.b16 %v149
    %v446 = vunpack.c.l.b16 %v150
    %v447 = vunpack.c.l.b16 %v151
    %v448 = vunpack.c.l.b16 %v152
    %v449 = vunpack.c.l.b16 %v153
    %v450 = vunpack.c.l.b16 %v154
    %v451 = vunpack.c.l.b16 %v155
    %v452 = vunpack.c.l.b16 %v156
    %v453 = vunpack.c.l.b16 %v157
    %v454 = vunpack.c.l.b16 %v158
    %v455 = vunpack.c.l.b16 %v159
    %v456 = vunpack.c.l.b16 %v160
    %v457 = vunpack.c.l.b16 %v161
    %v458 = vunpack.c.l.b16 %v162
    %v459 = vunpack.c.l.b16 %v163
    %v460 = vunpack.c.l.b16 %v164
    %v461 = vunpack.c.l.b16 %v165
    %v462 = vunpack.c.l.b16 %v166
    %v463 = vunpack.c.l.b16 %v167
    %v464 = vunpack.c.l.b16 %v168
    %v465 = vunpack.c.l.b16 %v169
    %v466 = vpack.c.b16 %v339, %v338
    %v467 = vpack.c.b16 %v341, %v340
    %v468 = vpack.c.b16 %v343, %v342
    %v469 = vpack.c.b16 %v345, %v344
    %v470 = vpack.c.b16 %v347, %v346
    %v471 = vpack.c.b16 %v349, %v348
    %v472 = vpack.c.b16 %v351, %v350
    %v473 = vpack.c.b16 %v353, %v352
    %v474 = vpack.c.b16 %v355, %v354
    %v475 = vpack.c.b16 %v357, %v356
    %v476 = vpack.c.b16 %v359, %v358
    %v477 = vpack.c.b16 %v361, %v360
    %v478 = vpack.c.b16 %v363, %v362
    %v479 = vpack.c.b16 %v365, %v364
    %v480 = vpack.c.b16 %v367, %v366
    %v481 = vpack.c.b16 %v369, %v368
    %v482 = vpack.c.b16 %v371, %v370
    %v483 = vpack.c.b16 %v373, %v372
    %v484 = vpack.c.b16 %v375, %v374
    %v485 = vpack.c.b16 %v377, %v376
    %v486 = vpack.c.b16 %v379, %v378
    %v487 = vpack.c.b16 %v381, %v380
    %v488 = vpack.c.b16 %v383, %v382
    %v489 = vpack.c.b16 %v385, %v384
    %v490 = vpack.c.b16 %v387, %v386
    %v491 = vpack.c.b16 %v389, %v388
    %v492 = vpack.c.b16 %v391, %v390
    %v493 = vpack.c.b16 %v393, %v392
    %v494 = vpack.c.b16 %v395, %v394
    %v495 = vpack.c.b16 %v397, %v396
    %v496 = vpack.c.b16 %v399, %v398
    %v497 = vpack.c.b16 %v401, %v400
    %v498 = vpack.c.b16 %v403, %v402
    %v499 = vpack.c.b16 %v405, %v404
    %v500 = vpack.c.b16 %v407, %v406
    %v501 = vpack.c.b16 %v409, %v408
    %v502 = vpack.c.b16 %v411, %v410
    %v503 = vpack.c.b16 %v413, %v412
    %v504 = vpack.c.b16 %v415, %v414
    %v505 = vpack.c.b16 %v417, %v416
    %v506 = vpack.c.b16 %v419, %v418
    %v507 = vpack.c.b16 %v421, %v420
    %v508 = vpack.c.b16 %v423, %v422
    %v509 = vpack.c.b16 %v425, %v424
    %v510 = vpack.c.b16 %v427, %v426
    %v511 = vpack.c.b16 %v429, %v428
    %v512 = vpack.c.b16 %v431, %v430
    %v513 = vpack.c.b16 %v433, %v432
    %v514 = vpack.c.b16 %v435, %v434
    %v515 = vpack.c.b16 %v437, %v436
    %v516 = vpack.c.b16 %v439, %v438
    %v517 = vpack.c.b16 %v441, %v440
    %v518 = vpack.c.b16 %v443, %v442
    %v519 = vpack.c.b16 %v445, %v444
    %v520 = vpack.c.b16 %v447, %v446
    %v521 = vpack.c.b16 %v449, %v448
    %v522 = vpack.c.b16 %v451, %v450
    %v523 = vpack.c.b16 %v453, %v452
    %v524 = vpack.c.b16 %v455, %v454
    %v525 = vpack.c.b16 %v457, %v456
    %v526 = vpack.c.b16 %v459, %v458
    %v527 = vpack.c.b16 %v461, %v460
    %v528 = vpack.c.b16 %v463, %v462
    %v529 = vpack.c.b16 %v465, %v464
    %594 = vmatpush.bf16.msra.mxu0 %v473
    %595 = vmatpush.bf16.msra.mxu0 %v472
    %596 = vmatpush.bf16.msra.mxu0 %v471
    %597 = vmatpush.bf16.msra.mxu0 %v470
    %598 = vmatpush.bf16.msra.mxu0 %v469
    %599 = vmatpush.bf16.msra.mxu0 %v468
    %600 = vmatpush.bf16.msra.mxu0 %v467
    %601 = vmatpush.bf16.msra.mxu0 %v466
    %602 = vmatmul.bf16.gmra.mxu0 %v194
    %v603 = vpop.f32.mrf.mxu0
    %v604 = vadd.f32 0.0, %v603
    %v605 = vpop.f32.mrf.mxu0
    %v606 = vadd.f32 0.0, %v605
    %607 = vdwg.mxu0
    %608 = vmatpush.bf16.msra.mxu0 %v481
    %609 = vmatpush.bf16.msra.mxu0 %v480
    %610 = vmatpush.bf16.msra.mxu0 %v479
    %611 = vmatpush.bf16.msra.mxu0 %v478
    %612 = vmatpush.bf16.msra.mxu0 %v477
    %613 = vmatpush.bf16.msra.mxu0 %v476
    %614 = vmatpush.bf16.msra.mxu0 %v475
    %615 = vmatpush.bf16.msra.mxu0 %v474
    %616 = vmatmul.bf16.gmra.mxu0 %v195
    %v617 = vpop.f32.mrf.mxu0
    %v618 = vadd.f32 %v604, %v617
    %v619 = vpop.f32.mrf.mxu0
    %v620 = vadd.f32 %v606, %v619
    %621 = vdwg.mxu0
    %622 = vmatpush.bf16.msra.mxu0 %v489
    %623 = vmatpush.bf16.msra.mxu0 %v488
    %624 = vmatpush.bf16.msra.mxu0 %v487
    %625 = vmatpush.bf16.msra.mxu0 %v486
    %626 = vmatpush.bf16.msra.mxu0 %v485
    %627 = vmatpush.bf16.msra.mxu0 %v484
    %628 = vmatpush.bf16.msra.mxu0 %v483
    %629 = vmatpush.bf16.msra.mxu0 %v482
    %630 = vmatmul.bf16.gmra.mxu0 %v196
    %v631 = vpop.f32.mrf.mxu0
    %v632 = vadd.f32 %v618, %v631
    %v633 = vpop.f32.mrf.mxu0
    %v634 = vadd.f32 %v620, %v633
    %635 = vdwg.mxu0
    %636 = vmatpush.bf16.msra.mxu0 %v497
    %637 = vmatpush.bf16.msra.mxu0 %v496
    %638 = vmatpush.bf16.msra.mxu0 %v495
    %639 = vmatpush.bf16.msra.mxu0 %v494
    %640 = vmatpush.bf16.msra.mxu0 %v493
    %641 = vmatpush.bf16.msra.mxu0 %v492
    %642 = vmatpush.bf16.msra.mxu0 %v491
    %643 = vmatpush.bf16.msra.mxu0 %v490
    %644 = vmatmul.bf16.gmra.mxu0 %v197
    %v645 = vpop.f32.mrf.mxu0
    %v646 = vadd.f32 %v632, %v645
    %v647 = vpop.f32.mrf.mxu0
    %v648 = vadd.f32 %v634, %v647
    %649 = vdwg.mxu0
    %650 = vmatpush.bf16.msra.mxu0 %v505
    %651 = vmatpush.bf16.msra.mxu0 %v504
    %652 = vmatpush.bf16.msra.mxu0 %v503
    %653 = vmatpush.bf16.msra.mxu0 %v502
    %654 = vmatpush.bf16.msra.mxu0 %v501
    %655 = vmatpush.bf16.msra.mxu0 %v500
    %656 = vmatpush.bf16.msra.mxu0 %v499
    %657 = vmatpush.bf16.msra.mxu0 %v498
    %658 = vmatmul.bf16.gmra.mxu0 %v198
    %v659 = vpop.f32.mrf.mxu0
    %v660 = vadd.f32 %v646, %v659
    %v661 = vpop.f32.mrf.mxu0
    %v662 = vadd.f32 %v648, %v661
    %663 = vdwg.mxu0
    %664 = vmatpush.bf16.msra.mxu0 %v513
    %665 = vmatpush.bf16.msra.mxu0 %v512
    %666 = vmatpush.bf16.msra.mxu0 %v511
    %667 = vmatpush.bf16.msra.mxu0 %v510
    %668 = vmatpush.bf16.msra.mxu0 %v509
    %669 = vmatpush.bf16.msra.mxu0 %v508
    %670 = vmatpush.bf16.msra.mxu0 %v507
    %671 = vmatpush.bf16.msra.mxu0 %v506
    %672 = vmatmul.bf16.gmra.mxu0 %v199
    %v673 = vpop.f32.mrf.mxu0
    %v674 = vadd.f32 %v660, %v673
    %v675 = vpop.f32.mrf.mxu0
    %v676 = vadd.f32 %v662, %v675
    %677 = vdwg.mxu0
    %678 = vmatpush.bf16.msra.mxu0 %v521
    %679 = vmatpush.bf16.msra.mxu0 %v520
    %680 = vmatpush.bf16.msra.mxu0 %v519
    %681 = vmatpush.bf16.msra.mxu0 %v518
    %682 = vmatpush.bf16.msra.mxu0 %v517
    %683 = vmatpush.bf16.msra.mxu0 %v516
    %684 = vmatpush.bf16.msra.mxu0 %v515
    %685 = vmatpush.bf16.msra.mxu0 %v514
    %686 = vmatmul.bf16.gmra.mxu0 %v200
    %v687 = vpop.f32.mrf.mxu0
    %v688 = vadd.f32 %v674, %v687
    %v689 = vpop.f32.mrf.mxu0
    %v690 = vadd.f32 %v676, %v689
    %691 = vdwg.mxu0
    %692 = vmatpush.bf16.msra.mxu0 %v529
    %693 = vmatpush.bf16.msra.mxu0 %v528
    %694 = vmatpush.bf16.msra.mxu0 %v527
    %695 = vmatpush.bf16.msra.mxu0 %v526
    %696 = vmatpush.bf16.msra.mxu0 %v525
    %697 = vmatpush.bf16.msra.mxu0 %v524
    %698 = vmatpush.bf16.msra.mxu0 %v523
    %699 = vmatpush.bf16.msra.mxu0 %v522
    %700 = vmatmul.bf16.gmra.mxu0 %v201
    %v701 = vpop.f32.mrf.mxu0
    %v702 = vadd.f32 %v688, %v701
    %v703 = vpop.f32.mrf.mxu0
    %v704 = vadd.f32 %v690, %v703
    %705 = vdwg.mxu0
    %v706 = vadd.f32 %v32, %v702
    %v707 = vadd.f32 %v33, %v704
    %vm708 = vcmask 261120
    %709 = vst.msk [vmem:[#allocation2] sm:$0xff] %vm708, %v706
    %710 = vst.msk [vmem:[#allocation2 + $0x8] sm:$0xff] %vm708, %v707
    // Predicated region
    $region26: #{tpu_custom_call.1} parent=1 // pred_check
      %p711 = pneg %p25
    $region27: #{tpu_custom_call.1} parent=1 // pred_check_branch
      %713 = sbr.rel (%p711) target = $region29
    $region28: #{tpu_custom_call.1} parent=1 // pred_region
      %v714 = vld [vmem:[#allocation2] sm:$0xff]
      %v715 = vld [vmem:[#allocation2 + $0x8] sm:$0xff]
      %v716 = vld [vmem:[%s2] sm:$0x1]
      %v718 = vperm.slane %v716, 0
      %v720 = vadd.f32 %v714, %v718
      %v721 = vadd.f32 %v715, %v718
      %722 = vst.msk [vmem:[#allocation3] sm:$0xff] %vm708, %v720
      %723 = vst.msk [vmem:[#allocation3 + $0x8] sm:$0xff] %vm708, %v721
      %v724 = vpack.c.bf16 %v721, %v720
      %v725 = vld [vmem:[%s3] sm:$0xf]
      %v726 = vld [vmem:[%s3 + $0x4] sm:$0xf]
      %v727 = vld [vmem:[%s3 + $0x8] sm:$0xf]
      %v728 = vld [vmem:[%s3 + $0xc] sm:$0xf]
      %v729 = vld [vmem:[%s4] sm:$0x1]
      %v731 = vperm.slane %v729, 0
      %v737 = vunpack.c.l.b16 %v725
      %v738 = vunpack.c.l.b16 %v726
      %v739 = vunpack.c.l.b16 %v727
      %v740 = vunpack.c.l.b16 %v728
      %v741 = vpack.c.b16 %v738, %v737
      %v742 = vpack.c.b16 %v740, %v739
      %v746 = vsel %vm708, %v724, 0
      %748 = vmatpush.bf16.msra.mxu0 0
      %749 = vmatpush.bf16.msra.mxu0 0
      %750 = vmatpush.bf16.msra.mxu0 0
      %751 = vmatpush.bf16.msra.mxu0 0
      %752 = vmatpush.bf16.msra.mxu0 0
      %753 = vmatpush.bf16.msra.mxu0 0
      %754 = vmatpush.bf16.msra.mxu0 %v742
      %755 = vmatpush.bf16.msra.mxu0 %v741
      %756 = vmatmul.bf16.gmra.mxu0 %v746
      %v757 = vpop.f32.mrf.mxu0
      %v758 = vadd.f32 %v731, %v757
      %v759 = vpop.f32.mrf.mxu0
      %v760 = vadd.f32 %v731, %v759
      %761 = vdwg.mxu0
      %vm762 = vcmask 80896
      %763 = vst.msk [vmem:[#allocation5] sm:$0xff] %vm762, %v758
      %764 = vst.msk [vmem:[#allocation5 + $0x8] sm:$0xff] %vm762, %v760
    $region29: #{tpu_custom_call.1} parent=1 // pred_fallthru
      _
    // Predicated region
    $region30: #{tpu_custom_call.1} parent=1 // pred_check
      _
    $region31: #{tpu_custom_call.1} parent=1 // pred_check_branch
      %766 = sbr.rel (0) target = $region33
    $region32: #{tpu_custom_call.1} parent=1 // pred_region
      %768 = vsyncadd [#allocation4], 0
      %s769 = sshll.u32 [#allocation3], 4
      %s770 = int_to_ptr.vmem [resolvable:$true] %s769
      %s771 = sshll.u32 %s5, 4
      %s772 = int_to_ptr.hbm [resolvable:$true] %s771
      %777 = dma.vmem_to_hbm [thread:$0]  %s770, 256, %s772, [#allocation4], 128, 128, 8
    $region33: #{tpu_custom_call.1} parent=1 // pred_fallthru
      _
    // Predicated region
    $region34: #{tpu_custom_call.1} parent=1 // pred_check
      _
    $region35: #{tpu_custom_call.1} parent=1 // pred_check_branch
      %779 = sbr.rel (0) target = $region37
    $region36: #{tpu_custom_call.1} parent=1 // pred_region
      %781 = vsyncadd [#allocation6], 0
      %s782 = sshll.u32 [#allocation5], 4
      %s783 = int_to_ptr.vmem [resolvable:$true] %s782
      %s784 = sshll.u32 %s6, 4
      %s785 = int_to_ptr.hbm [resolvable:$true] %s784
      %790 = dma.vmem_to_hbm [thread:$0]  %s783, 256, %s785, [#allocation6], 128, 128, 8
    $region37: #{tpu_custom_call.1} parent=1 // pred_fallthru
      _
    // Predicated region
    $region38: #{tpu_custom_call.1} parent=1 // pred_check
      _
    $region39: #{tpu_custom_call.1} parent=1 // pred_check_branch
      %792 = sbr.rel (0) target = $region41
    $region40: #{tpu_custom_call.1} parent=1 // pred_region
      %794 = dma.done [#allocation4], 256
    $region41: #{tpu_custom_call.1} parent=1 // pred_fallthru
      _
    // Predicated region
    $region42: #{tpu_custom_call.1} parent=1 // pred_check
      _
    $region43: #{tpu_custom_call.1} parent=1 // pred_check_branch
      %796 = sbr.rel (0) target = $region45
    $region44: #{tpu_custom_call.1} parent=1 // pred_region
      %798 = dma.done [#allocation6], 256
    $region45: #{tpu_custom_call.1} parent=1 // pred_fallthru
      _
    %799 = vsyncpa [#allocation4], 1
    %800 = vsyncpa [#allocation6], 1

</llo_original>
